<compile_context>
chip_gen: v6e
topology: v6e:2x2x1
jax: 0.10.0
libtpu: 0.0.40
codegen_flags: <defaults>
</compile_context>

<pallas_src>
import functools
import math

import jax
import jax.numpy as jnp
from jax import lax
from jax.experimental import pallas as pl
from jax.experimental.pallas import tpu as pltpu


# ----------------------------------------------------------------------------
# tiling helper
# ----------------------------------------------------------------------------
def _pick_tile(dim, cap, align):
    """Largest `align`-multiple divisor of `dim` that is <= cap; returns `dim`
    itself when it already fits (a full-extent block is always legal)."""
    if dim <= cap:
        return dim
    t = (cap // align) * align
    while t >= align:
        if dim % t == 0:
            return t
        t -= align
    return dim


# ----------------------------------------------------------------------------
# Kernel 1: fused, head-major Q/K/V projection
#   x:(n_src, R, D) @ w3:(3h, D, dk) + b3:(3h, 1, dk)  ->  qkv:(3h, R, dk)
# ----------------------------------------------------------------------------
def qkv_kernel(x_ref, w_ref, b_ref, o_ref, acc_ref):
    @pl.when(pl.program_id(2) == 0)
    def _():
        acc_ref[...] = jnp.zeros_like(acc_ref)

    acc_ref[...] += jnp.dot(
        x_ref[0].astype(jnp.bfloat16),
        w_ref[0].astype(jnp.bfloat16),
        preferred_element_type=jnp.float32,
    )

    @pl.when(pl.program_id(2) == pl.num_programs(2) - 1)
    def _():
        o_ref[0] = (acc_ref[...] + b_ref[0]).astype(o_ref.dtype)


def qkv_projection(w3, b3, q_in, k_in, v_in, h):
    B, S, D = q_in.shape
    dk = D // h
    R = B * S

    same = (q_in is k_in) and (k_in is v_in)
    if same:
        # self-attention fast path: read the activation slab once per group.
        xs = q_in.reshape(1, R, D)
        x_map = lambda i, g, k: (0, i, k)
    else:
        xs = jnp.stack(
            [q_in.reshape(R, D), k_in.reshape(R, D), v_in.reshape(R, D)], axis=0
        )
        x_map = lambda i, g, k: (g // h, i, k)

    tm = _pick_tile(R, 256, 8)
    tk = _pick_tile(D, 512, 128)

    return pl.pallas_call(
        qkv_kernel,
        out_shape=jax.ShapeDtypeStruct((3 * h, R, dk), q_in.dtype),
        grid=(R // tm, 3 * h, D // tk),
        in_specs=[
            pl.BlockSpec((1, tm, tk), x_map),
            pl.BlockSpec((1, tk, dk), lambda i, g, k: (g, k, 0)),
            pl.BlockSpec((1, 1, dk), lambda i, g, k: (g, 0, 0)),
        ],
        out_specs=pl.BlockSpec((1, tm, dk), lambda i, g, k: (g, i, 0)),
        scratch_shapes=[pltpu.VMEM((tm, dk), jnp.float32)],
        compiler_params=pltpu.CompilerParams(
            dimension_semantics=("parallel", "parallel", "arbitrary")
        ),
    )(xs, w3, b3)


# ----------------------------------------------------------------------------
# Kernel 2: per-(batch, head) scaled-dot-product attention
#   qkv:(3h, R, dk), mask_add:(B, 1, S)  ->  attn:(h, R, dk)
# ----------------------------------------------------------------------------
def attn_kernel(q_ref, k_ref, v_ref, m_ref, o_ref, *, scale):
    q = q_ref[0].astype(jnp.bfloat16)                      # (S, dk)
    k = k_ref[0].astype(jnp.bfloat16)                      # (S, dk)
    # Q·K^T without an explicit transpose: contract the dk dims directly.
    s = lax.dot_general(
        q, k, (((1,), (1,)), ((), ())), preferred_element_type=jnp.float32
    )
    s = s * scale + m_ref[0]                               # additive mask (0 / -1e9)
    s = s - jnp.max(s, axis=-1, keepdims=True)             # f32 softmax
    p = jnp.exp(s)
    p = p * pl.reciprocal(jnp.sum(p, axis=-1, keepdims=True), approx=True)
    o = jnp.dot(
        p.astype(jnp.bfloat16),
        v_ref[0].astype(jnp.bfloat16),
        preferred_element_type=jnp.float32,
    )
    o_ref[0] = o.astype(o_ref.dtype)


def attention(qkv, mask_add, B, S, h, dk):
    R = B * S
    return pl.pallas_call(
        functools.partial(attn_kernel, scale=1.0 / math.sqrt(dk)),
        out_shape=jax.ShapeDtypeStruct((h, R, dk), qkv.dtype),
        grid=(B, h),
        in_specs=[
            pl.BlockSpec((1, S, dk), lambda b, hh: (hh, b, 0)),          # Q head
            pl.BlockSpec((1, S, dk), lambda b, hh: (h + hh, b, 0)),      # K head
            pl.BlockSpec((1, S, dk), lambda b, hh: (2 * h + hh, b, 0)),  # V head
            pl.BlockSpec((1, 1, S), lambda b, hh: (b, 0, 0)),            # mask
        ],
        out_specs=pl.BlockSpec((1, S, dk), lambda b, hh: (hh, b, 0)),
        compiler_params=pltpu.CompilerParams(
            dimension_semantics=("parallel", "parallel")
        ),
    )(qkv, qkv, qkv, mask_add)


# ----------------------------------------------------------------------------
# Kernel 3: output projection, contracting over (head, dk) as the K grid axis
#   attn:(h, R, dk) @ wo2:(h, dk, D) + bo:(1, D)  ->  (R, D)
# ----------------------------------------------------------------------------
def out_proj_kernel(a_ref, w_ref, b_ref, o_ref, acc_ref):
    @pl.when(pl.program_id(2) == 0)
    def _():
        acc_ref[...] = jnp.zeros_like(acc_ref)

    acc_ref[...] += jnp.dot(
        a_ref[0].astype(jnp.bfloat16),
        w_ref[0].astype(jnp.bfloat16),
        preferred_element_type=jnp.float32,
    )

    @pl.when(pl.program_id(2) == pl.num_programs(2) - 1)
    def _():
        o_ref[...] = (acc_ref[...] + b_ref[...]).astype(o_ref.dtype)


def out_projection(attn, wo2, bo):
    h, R, dk = attn.shape
    D = wo2.shape[-1]
    tm = _pick_tile(R, 256, 8)
    tn = _pick_tile(D, 256, 128)
    return pl.pallas_call(
        out_proj_kernel,
        out_shape=jax.ShapeDtypeStruct((R, D), attn.dtype),
        grid=(R // tm, D // tn, h),
        in_specs=[
            pl.BlockSpec((1, tm, dk), lambda i, j, k: (k, i, 0)),
            pl.BlockSpec((1, dk, tn), lambda i, j, k: (k, 0, j)),
            pl.BlockSpec((1, tn), lambda i, j, k: (0, j)),
        ],
        out_specs=pl.BlockSpec((tm, tn), lambda i, j, k: (i, j)),
        scratch_shapes=[pltpu.VMEM((tm, tn), jnp.float32)],
        compiler_params=pltpu.CompilerParams(
            dimension_semantics=("parallel", "parallel", "arbitrary")
        ),
    )(attn, wo2, bo)


# ----------------------------------------------------------------------------
# Forward pass:  SelfAttention(query, key, value, mask)
# ----------------------------------------------------------------------------
def self_attention_forward(packed, query, key, value, mask, *, num_heads):
    B, S, D = query.shape
    dk = D // num_heads

    # 1. fused head-major Q/K/V projection: (3h, B*S, dk)
    qkv = qkv_projection(packed["w3"], packed["b3"], query, key, value, num_heads)

    # 2. additive mask: masked_fill(mask == 0, -1e9) folded into the scores.
    mask_add = jnp.where(
        mask == 0, jnp.float32(-1e9), jnp.float32(0.0)
    ).reshape(B, 1, S)

    # 3. scaled dot-product attention per (batch, head): (h, B*S, dk)
    attn = attention(qkv, mask_add, B, S, num_heads, dk)

    # 4. output projection (contracts head & dk without merging heads in HBM)
    out = out_projection(attn, packed["wo2"], packed["bo"])
    return out.reshape(B, S, D)


# ----------------------------------------------------------------------------
# Parameter construction / packing
# ----------------------------------------------------------------------------
def init_raw_params(key, d_model):
    ks = jax.random.split(key, 8)
    w = lambda k: 0.05 * jax.random.normal(k, (d_model, d_model), jnp.float32)
    b = lambda k: 0.02 * jax.random.normal(k, (d_model,), jnp.float32)
    return {
        "wq": w(ks[0]), "bq": b(ks[1]),
        "wk": w(ks[2]), "bk": b(ks[3]),
        "wv": w(ks[4]), "bv": b(ks[5]),
        "wo": w(ks[6]), "bo": b(ks[7]),
    }


def pack_params(raw, h):
    """One-time repack of the 4 nn.Linear weights into kernel-friendly layouts."""
    D = raw["wq"].shape[0]
    dk = D // h
    heads_w = lambda w: w.reshape(D, h, dk).transpose(1, 0, 2)   # (h, D, dk)
    heads_b = lambda b: b.reshape(h, 1, dk)                      # (h, 1, dk)
    return {
        "w3": jnp.concatenate(
            [heads_w(raw["wq"]), heads_w(raw["wk"]), heads_w(raw["wv"])], axis=0
        ),                                                       # (3h, D, dk)
        "b3": jnp.concatenate(
            [heads_b(raw["bq"]), heads_b(raw["bk"]), heads_b(raw["bv"])], axis=0
        ),                                                       # (3h, 1, dk)
        "wo2": raw["wo"].reshape(h, dk, D),                      # (h, dk, D)
        "bo": raw["bo"].reshape(1, D),                           # (1, D)
    }


# ----------------------------------------------------------------------------
# Pure-JAX reference (mirrors the PyTorch forward, eval mode)
# ----------------------------------------------------------------------------
def reference_self_attention(raw, q_in, k_in, v_in, mask, h):
    B, S, D = q_in.shape
    dk = D // h

    def proj(x, w, b):
        return (x.reshape(B * S, D) @ w + b).reshape(B, S, h, dk).transpose(0, 2, 1, 3)

    q = proj(q_in, raw["wq"], raw["bq"])
    k = proj(k_in, raw["wk"], raw["bk"])
    v = proj(v_in, raw["wv"], raw["bv"])
    s = jnp.einsum("bhqd,bhkd->bhqk", q, k) / math.sqrt(dk)
    s = jnp.where(mask[:, None, None, :] == 0, -1e9, s)
    p = jax.nn.softmax(s, axis=-1)
    o = jnp.einsum("bhqk,bhkd->bhqd", p, v).transpose(0, 2, 1, 3).reshape(B * S, D)
    return (o @ raw["wo"] + raw["bo"]).reshape(B, S, D)


# ----------------------------------------------------------------------------
if __name__ == "__main__":
    B, S, D, H = 2, 8, 32, 4        # batch, seq, c_model, heads  (d_k = 8)

    key = jax.random.PRNGKey(0)
    kx, kp = jax.random.split(key)
    x = jax.random.normal(kx, (B, S, D), jnp.float32)
    # key-padding mask: second batch element has 3 padded positions
    lengths = jnp.array([S, S - 3])
    mask = (jnp.arange(S)[None, :] < lengths[:, None]).astype(jnp.float32)

    raw = init_raw_params(kp, D)
    packed = pack_params(raw, H)

    out = self_attention_forward(packed, x, x, x, mask, num_heads=H)
    out = jax.block_until_ready(out)

    assert out.shape == (B, S, D)
    assert jnp.all(jnp.isfinite(out))

    ref = reference_self_attention(raw, x, x, x, mask, H)
    err = float(jnp.max(jnp.abs(out - ref)))
    assert err < 2e-2, f"max abs error vs reference: {err}"

    print("KERNEL_OK")
</pallas_src>

<mosaic_0001>
module attributes {stable_mosaic.version = 11 : i64} {
  func.func @qkv_kernel(%arg0: i32, %arg1: i32, %arg2: i32, %arg3: memref<1x16x32xf32, #tpu.memory_space<vmem>>, %arg4: memref<1x32x8xf32, #tpu.memory_space<vmem>>, %arg5: memref<1x1x8xf32, #tpu.memory_space<vmem>>, %arg6: memref<1x16x8xf32, #tpu.memory_space<vmem>>, %arg7: memref<16x8xf32, #tpu.memory_space<vmem>>) attributes {dimension_semantics = [#tpu.dimension_semantics<parallel>, #tpu.dimension_semantics<parallel>, #tpu.dimension_semantics<arbitrary>], iteration_bounds = array<i64: 1, 12, 1>, scalar_prefetch = 0 : i64, scratch_operands = 1 : i64, tpu.core_type = #tpu.core_type<tc>, window_params = [{transform_indices = @transform_0, window_bounds = array<i64: 1, 16, 32>}, {transform_indices = @transform_1, window_bounds = array<i64: 1, 32, 8>}, {transform_indices = @transform_2, window_bounds = array<i64: 1, 1, 8>}, {transform_indices = @transform_3, window_bounds = array<i64: 1, 16, 8>}]} {
    %c0_i32 = arith.constant 0 : i32
    %0 = arith.cmpi eq, %arg2, %c0_i32 : i32
    %1 = arith.extui %0 : i1 to i32
    %c0_i32_0 = arith.constant 0 : i32
    %2 = arith.cmpi ne, %1, %c0_i32_0 : i32
    scf.if %2 {
      %cst_12 = arith.constant 0.000000e+00 : f32
      %16 = vector.broadcast %cst_12 : f32 to vector<16x8xf32>
      %c0_13 = arith.constant 0 : index
      %c0_14 = arith.constant 0 : index
      %17 = vector.load %arg7[%c0_13, %c0_14] : memref<16x8xf32, #tpu.memory_space<vmem>>, vector<16x8xf32>
      tpu.vector_store %arg7[%c0_13, %c0_14], %16 {strides = array<i32>} : memref<16x8xf32, #tpu.memory_space<vmem>>, vector<16x8xf32>,
    } else {
    }
    %c0 = arith.constant 0 : index
    %c0_1 = arith.constant 0 : index
    %3 = vector.load %arg7[%c0, %c0_1] : memref<16x8xf32, #tpu.memory_space<vmem>>, vector<16x8xf32>
    %c0_2 = arith.constant 0 : index
    %c0_3 = arith.constant 0 : index
    %c0_4 = arith.constant 0 : index
    %4 = vector.load %arg3[%c0_2, %c0_3, %c0_4] : memref<1x16x32xf32, #tpu.memory_space<vmem>>, vector<1x16x32xf32>
    %5 = vector.shape_cast %4 : vector<1x16x32xf32> to vector<16x32xf32>
    %6 = arith.truncf %5 : vector<16x32xf32> to vector<16x32xbf16>
    %c0_5 = arith.constant 0 : index
    %c0_6 = arith.constant 0 : index
    %c0_7 = arith.constant 0 : index
    %7 = vector.load %arg4[%c0_5, %c0_6, %c0_7] : memref<1x32x8xf32, #tpu.memory_space<vmem>>, vector<1x32x8xf32>
    %8 = vector.shape_cast %7 : vector<1x32x8xf32> to vector<32x8xf32>
    %9 = arith.truncf %8 : vector<32x8xf32> to vector<32x8xbf16>
    %cst = arith.constant dense<0.000000e+00> : vector<16x8xf32>
    %10 = tpu.matmul %6, %9, %cst {dimension_numbers = #tpu.dot_dimension_numbers<[1], [0], [0], [1], [0, 0, 1, 1], [], []>} : vector<16x32xbf16>, vector<32x8xbf16>, vector<16x8xf32> -> vector<16x8xf32>
    %11 = arith.addf %3, %10 : vector<16x8xf32>
    %c0_8 = arith.constant 0 : index
    %c0_9 = arith.constant 0 : index
    %12 = vector.load %arg7[%c0_8, %c0_9] : memref<16x8xf32, #tpu.memory_space<vmem>>, vector<16x8xf32>
    tpu.vector_store %arg7[%c0_8, %c0_9], %11 {strides = array<i32>} : memref<16x8xf32, #tpu.memory_space<vmem>>, vector<16x8xf32>,
    %c0_i32_10 = arith.constant 0 : i32
    %13 = arith.cmpi eq, %arg2, %c0_i32_10 : i32
    %14 = arith.extui %13 : i1 to i32
    %c0_i32_11 = arith.constant 0 : i32
    %15 = arith.cmpi ne, %14, %c0_i32_11 : i32
    scf.if %15 {
      %c0_12 = arith.constant 0 : index
      %c0_13 = arith.constant 0 : index
      %16 = vector.load %arg7[%c0_12, %c0_13] : memref<16x8xf32, #tpu.memory_space<vmem>>, vector<16x8xf32>
      %c0_14 = arith.constant 0 : index
      %c0_15 = arith.constant 0 : index
      %c0_16 = arith.constant 0 : index
      %17 = vector.load %arg5[%c0_14, %c0_15, %c0_16] : memref<1x1x8xf32, #tpu.memory_space<vmem>>, vector<1x1x8xf32>
      %18 = vector.shape_cast %17 : vector<1x1x8xf32> to vector<1x8xf32>
      %19 = vector.broadcast %18 : vector<1x8xf32> to vector<16x8xf32>
      %20 = arith.addf %16, %19 : vector<16x8xf32>
      %c0_17 = arith.constant 0 : index
      %c0_18 = arith.constant 0 : index
      %c0_19 = arith.constant 0 : index
      %21 = vector.load %arg6[%c0_17, %c0_18, %c0_19] : memref<1x16x8xf32, #tpu.memory_space<vmem>>, vector<1x16x8xf32>
      %22 = vector.shape_cast %21 : vector<1x16x8xf32> to vector<16x8xf32>
      %23 = vector.shape_cast %20 : vector<16x8xf32> to vector<1x16x8xf32>
      tpu.vector_store %arg6[%c0_17, %c0_18, %c0_19], %23 {strides = array<i32>} : memref<1x16x8xf32, #tpu.memory_space<vmem>>, vector<1x16x8xf32>,
    } else {
    }
    return
  }
  func.func @transform_0(%arg0: i32, %arg1: i32, %arg2: i32) -> (i32, i32, i32) {
    %c0_i32 = arith.constant 0 : i32
    %c0_i32_0 = arith.constant 0 : i32
    return %c0_i32, %arg0, %arg2 : i32, i32, i32
  }
  func.func @transform_1(%arg0: i32, %arg1: i32, %arg2: i32) -> (i32, i32, i32) {
    %c0_i32 = arith.constant 0 : i32
    %c0_i32_0 = arith.constant 0 : i32
    return %arg1, %arg2, %c0_i32 : i32, i32, i32
  }
  func.func @transform_2(%arg0: i32, %arg1: i32, %arg2: i32) -> (i32, i32, i32) {
    %c0_i32 = arith.constant 0 : i32
    %c0_i32_0 = arith.constant 0 : i32
    %c0_i32_1 = arith.constant 0 : i32
    return %arg1, %c0_i32, %c0_i32_0 : i32, i32, i32
  }
  func.func @transform_3(%arg0: i32, %arg1: i32, %arg2: i32) -> (i32, i32, i32) {
    %c0_i32 = arith.constant 0 : i32
    %c0_i32_0 = arith.constant 0 : i32
    return %arg1, %arg0, %c0_i32 : i32, i32, i32
  }
}

</mosaic_0001>

<llo_original>
// kernel: tpu_custom_call.1
$region0: #{tpu_custom_call.1}
  #allocation0 [shape = 'u32[]', space=smem, size = 0x4, offset = 0x4, fixed_abs, tag = 'smem constant byte address 0x4 - core index']
  #allocation1 [shape = 'u32[144,128]{1,0:T(1,128)}', space=vmem, size = 0x12000, scoped, tag = 'internal scratch']
  #allocation2 [shape = 'f32[16,8]{1,0:T(8,128)}', space=vmem, size = 0x2000, scoped, tag = 'scratch operand']
  %s0 = inlined_call_operand.vmem [shape: f32[1,16,32], index: 0, kind: input, shape index: {}]
  %s1 = inlined_call_operand.vmem [shape: f32[12,32,8], index: 1, kind: input, shape index: {}]
  %s2 = inlined_call_operand.vmem [shape: f32[12,1,8], index: 2, kind: input, shape index: {}]
  %s3 = inlined_call_operand.vmem [shape: f32[12,16,8], index: 3, kind: output, shape index: {}]
  %s4 = sld [smem:[#allocation0]]
  $region53: #{tpu_custom_call.1} parent=0
    _
  %s6 = ssub.s32 1, %s4
  %s7 = scalar_select 0, %s6, %s4
  loop: start=0, step=1, limit=14
  $region2: #{tpu_custom_call.1} parent=0 // loop_pre_header
    _
  $region3: #{tpu_custom_call.1} parent=0 // loop_header
    %s9 = sphi 0, %s13
    %p10 = scmp.ge.s32.totalorder %s9, 14
    %s16 = sphi 0, %s35
    %s17 = sphi 0, %s31
    %s18 = sphi 0, %s27
    %s19 = sphi 0, %s16
    %s20 = sphi 0, %s17
    %s21 = sphi 0, %s18
    %s22 = sphi 0, %s19
    %s23 = sphi 0, %s20
    %s24 = sphi 0, %s21
    %s40 = sphi 0, %s42
    %s43 = sphi 0, %s40
    %s44 = sphi 0, %s43
    %s60 = sphi 0, %s44
    %s68 = sphi 0, %s70
    %s71 = sphi 0, %s68
    %s72 = sphi 0, %s71
    %s88 = sphi 0, %s72
    %s94 = sphi 0, %s96
    %s97 = sphi 0, %s94
    %s98 = sphi 0, %s97
    %s114 = sphi 0, %s98
    %s122 = sphi 0, %s124
    %s125 = sphi 0, %s122
    %s126 = sphi 0, %s125
    %s142 = sphi 0, %s126
  $region4: #{tpu_custom_call.1} parent=0 // loop_header_branch
    %12 = sbr.rel (%p10) target = $region8
  $region5: #{tpu_custom_call.1} parent=0 // loop_body
    %s14 = ssub.s32 %s9, 1
    %s15 = ssub.s32 %s9, 2
    %s25 = sadd.s32 1, %s18
    %p26 = scmp.ge.s32.totalorder %s25, 1
    %s27 = scalar_select %p26, 0, %s25
    %s28 = sadd.s32 1, %s17
    %s29 = scalar_select %p26, %s28, %s17
    %p30 = scmp.ge.s32.totalorder %s29, 12
    %s31 = scalar_select %p30, 0, %s29
    %s32 = sadd.s32 1, %s16
    %s33 = scalar_select %p30, %s32, %s16
    %p34 = scmp.ge.s32.totalorder %s33, 1
    %s35 = scalar_select %p34, 0, %s33
    %s36 = ssub.s32 %s16, %s35
    %s37 = ssub.s32 %s18, %s27
    %s38 = sor.u32 %s36, %s37
    %p39 = scmp.eq.s32.totalorder %s38, 0
    %s41 = sadd.s32 %s40, 1
    %s42 = scalar_select %p39, %s40, %s41
    %p45 = pneg %p39
    %p46 = scmp.eq.s32.totalorder %s9, 11
    %p47 = por %p45, %p46
    %p48 = scmp.ne.s32.totalorder %s40, %s43
    %p49 = scmp.eq.s32.totalorder %s9, 0
    %p50 = por %p48, %p49
    %p51 = scmp.ne.s32.totalorder %s40, %s43
    %p52 = scmp.eq.s32.totalorder %s14, 11
    %p53 = por %p51, %p52
    %p54 = scmp.ne.s32.totalorder %s43, %s44
    %p55 = scmp.eq.s32.totalorder %s14, 0
    %p56 = por %p54, %p55
    %p57 = scmp.ne.s32.totalorder %s43, %s44
    %p58 = scmp.eq.s32.totalorder %s15, 11
    %p59 = por %p57, %p58
    %p61 = scmp.ne.s32.totalorder %s44, %s60
    %p62 = scmp.eq.s32.totalorder %s15, 0
    %p63 = por %p61, %p62
    %s64 = ssub.s32 %s17, %s31
    %s65 = ssub.s32 %s18, %s27
    %s66 = sor.u32 %s64, %s65
    %p67 = scmp.eq.s32.totalorder %s66, 0
    %s69 = sadd.s32 %s68, 1
    %s70 = scalar_select %p67, %s68, %s69
    %p73 = pneg %p67
    %p74 = scmp.eq.s32.totalorder %s9, 11
    %p75 = por %p73, %p74
    %p76 = scmp.ne.s32.totalorder %s68, %s71
    %p77 = scmp.eq.s32.totalorder %s9, 0
    %p78 = por %p76, %p77
    %p79 = scmp.ne.s32.totalorder %s68, %s71
    %p80 = scmp.eq.s32.totalorder %s14, 11
    %p81 = por %p79, %p80
    %p82 = scmp.ne.s32.totalorder %s71, %s72
    %p83 = scmp.eq.s32.totalorder %s14, 0
    %p84 = por %p82, %p83
    %p85 = scmp.ne.s32.totalorder %s71, %s72
    %p86 = scmp.eq.s32.totalorder %s15, 11
    %p87 = por %p85, %p86
    %p89 = scmp.ne.s32.totalorder %s72, %s88
    %p90 = scmp.eq.s32.totalorder %s15, 0
    %p91 = por %p89, %p90
    %s92 = ssub.s32 %s17, %s31
    %p93 = scmp.eq.s32.totalorder %s92, 0
    %s95 = sadd.s32 %s94, 1
    %s96 = scalar_select %p93, %s94, %s95
    %p99 = pneg %p93
    %p100 = scmp.eq.s32.totalorder %s9, 11
    %p101 = por %p99, %p100
    %p102 = scmp.ne.s32.totalorder %s94, %s97
    %p103 = scmp.eq.s32.totalorder %s9, 0
    %p104 = por %p102, %p103
    %p105 = scmp.ne.s32.totalorder %s94, %s97
    %p106 = scmp.eq.s32.totalorder %s14, 11
    %p107 = por %p105, %p106
    %p108 = scmp.ne.s32.totalorder %s97, %s98
    %p109 = scmp.eq.s32.totalorder %s14, 0
    %p110 = por %p108, %p109
    %p111 = scmp.ne.s32.totalorder %s97, %s98
    %p112 = scmp.eq.s32.totalorder %s15, 11
    %p113 = por %p111, %p112
    %p115 = scmp.ne.s32.totalorder %s98, %s114
    %p116 = scmp.eq.s32.totalorder %s15, 0
    %p117 = por %p115, %p116
    %s118 = ssub.s32 %s17, %s31
    %s119 = ssub.s32 %s16, %s35
    %s120 = sor.u32 %s118, %s119
    %p121 = scmp.eq.s32.totalorder %s120, 0
    %s123 = sadd.s32 %s122, 1
    %s124 = scalar_select %p121, %s122, %s123
    %p127 = pneg %p121
    %p128 = scmp.eq.s32.totalorder %s9, 11
    %p129 = por %p127, %p128
    %p130 = scmp.ne.s32.totalorder %s122, %s125
    %p131 = scmp.eq.s32.totalorder %s9, 0
    %p132 = por %p130, %p131
    %p133 = scmp.ne.s32.totalorder %s122, %s125
    %p134 = scmp.eq.s32.totalorder %s14, 11
    %p135 = por %p133, %p134
    %p136 = scmp.ne.s32.totalorder %s125, %s126
    %p137 = scmp.eq.s32.totalorder %s14, 0
    %p138 = por %p136, %p137
    %p139 = scmp.ne.s32.totalorder %s125, %s126
    %p140 = scmp.eq.s32.totalorder %s15, 11
    %p141 = por %p139, %p140
    %p143 = scmp.ne.s32.totalorder %s126, %s142
    %p144 = scmp.eq.s32.totalorder %s15, 0
    %p145 = por %p143, %p144
    %p146 = scmp.le.s32.totalorder 1, %s9
    %p147 = scmp.lt.s32.totalorder %s9, 13
    %p148 = pnand %p146, %p147
    %p149 = pneg %p148
    // Predicated region
    $region9: #{tpu_custom_call.1} parent=5 // pred_check
      _
    $region10: #{tpu_custom_call.1} parent=5 // pred_check_branch
      %151 = sbr.rel (%p148) target = $region12
    $region11: #{tpu_custom_call.1} parent=5 // pred_region
      %s152 = ssub.s32 %s9, 1
      // Predicated region
      $region13: #{tpu_custom_call.1} parent=11 // pred_check
        %p153 = pneg %p56
      $region14: #{tpu_custom_call.1} parent=11 // pred_check_branch
        %155 = sbr.rel (%p153) target = $region16
      $region15: #{tpu_custom_call.1} parent=11 // pred_region
        %s156 = smul.u32 2, %s19
        %p157 = scmp.lt.s32.totalorder %s156, 1
        %s158 = scalar_select %p157, %s156, 1
        %p159 = scmp.lt.s32.totalorder %s21, 0
        %s160 = scalar_select %p159, %s21, 0
        %s161 = sadd.s32 %s160, %s158
        %s162 = smul.addr %s161, 8
        %s163 = scalar_lea.vmem %s0, %s162
        %s164 = smul.u32 2, %s19
      $region16: #{tpu_custom_call.1} parent=11 // pred_fallthru
        _
    $region12: #{tpu_custom_call.1} parent=5 // pred_fallthru
      _
    %p165 = scmp.lt.s32.totalorder %s9, 12
    // Predicated region
    $region17: #{tpu_custom_call.1} parent=5 // pred_check
      %p166 = pneg %p165
    $region18: #{tpu_custom_call.1} parent=5 // pred_check_branch
      %168 = sbr.rel (%p166) target = $region20
    $region19: #{tpu_custom_call.1} parent=5 // pred_region
      // Predicated region
      $region21: #{tpu_custom_call.1} parent=19 // pred_check
        %p169 = pneg %p78
      $region22: #{tpu_custom_call.1} parent=19 // pred_check_branch
        %171 = sbr.rel (%p169) target = $region24
      $region23: #{tpu_custom_call.1} parent=19 // pred_region
        %s172 = smul.u32 4, %s18
        %p173 = scmp.lt.s32.totalorder %s17, 11
        %s174 = scalar_select %p173, %s17, 11
        %p175 = scmp.lt.s32.totalorder %s172, 3
        %s176 = scalar_select %p175, %s172, 3
        %s177 = smul.addr %s174, 4
        %s178 = sadd.s32 %s176, %s177
        %s179 = smul.addr %s178, 8
        %s180 = scalar_lea.vmem %s1, %s179
        %s181 = smul.u32 4, %s18
      $region24: #{tpu_custom_call.1} parent=19 // pred_fallthru
        _
      // Predicated region
      $region25: #{tpu_custom_call.1} parent=19 // pred_check
        %p182 = pneg %p104
      $region26: #{tpu_custom_call.1} parent=19 // pred_check_branch
        %184 = sbr.rel (%p182) target = $region28
      $region27: #{tpu_custom_call.1} parent=19 // pred_region
        %p185 = scmp.lt.s32.totalorder %s17, 11
        %s186 = scalar_select %p185, %s17, 11
        %s187 = scalar_lea.vmem %s2, %s186
      $region28: #{tpu_custom_call.1} parent=19 // pred_fallthru
        _
    $region20: #{tpu_custom_call.1} parent=5 // pred_fallthru
      _
    %p188 = scmp.le.s32.totalorder 1, %s9
    %p189 = scmp.lt.s32.totalorder %s9, 13
    %p190 = pnand %p188, %p189
    %p191 = pneg %p190
    // Predicated region
    $region29: #{tpu_custom_call.1} parent=5 // pred_check
      _
    $region30: #{tpu_custom_call.1} parent=5 // pred_check_branch
      %193 = sbr.rel (%p190) target = $region32
    $region31: #{tpu_custom_call.1} parent=5 // pred_region
      %s194 = ssub.s32 %s9, 1
      %s195 = smul.u32 2, %s19
      %p196 = scmp.lt.s32.totalorder %s195, 1
      %s197 = scalar_select %p196, %s195, 1
      %p198 = scmp.lt.s32.totalorder %s21, 0
      %s199 = scalar_select %p198, %s21, 0
      %s200 = sadd.s32 %s199, %s197
      %s201 = smul.addr %s200, 8
      %s202 = scalar_lea.vmem %s0, %s201
      %p203 = pneg %p56
      %p204 = pneg %p53
      %s205 = smul.u32 4, %s21
      %p206 = scmp.lt.s32.totalorder %s20, 11
      %s207 = scalar_select %p206, %s20, 11
      %p208 = scmp.lt.s32.totalorder %s205, 3
      %s209 = scalar_select %p208, %s205, 3
      %s210 = smul.addr %s207, 4
      %s211 = sadd.s32 %s209, %s210
      %s212 = smul.addr %s211, 8
      %s213 = scalar_lea.vmem %s1, %s212
      %p214 = pneg %p84
      %p215 = pneg %p81
      %p216 = scmp.lt.s32.totalorder %s20, 11
      %s217 = scalar_select %p216, %s20, 11
      %s218 = scalar_lea.vmem %s2, %s217
      %p219 = pneg %p110
      %p220 = pneg %p107
      %p221 = pneg %p138
      %p222 = pneg %p135
      %s223 = smul.u32 2, %s19
      %p224 = scmp.lt.s32.totalorder %s20, 11
      %s225 = scalar_select %p224, %s20, 11
      %p226 = scmp.lt.s32.totalorder %s223, 1
      %s227 = scalar_select %p226, %s223, 1
      %s228 = smul.addr %s225, 2
      %s229 = sadd.s32 %s227, %s228
      %s230 = smul.addr %s229, 8
      %s231 = scalar_lea.vmem %s3, %s230
      %s232 = smul.u32 2, %s19
      %p233 = scmp.lt.s32.totalorder %s232, 1
      %s234 = scalar_select %p233, %s232, 1
      %p235 = scmp.lt.s32.totalorder %s21, 0
      %s236 = scalar_select %p235, %s21, 0
      %s237 = sadd.s32 %s236, %s234
      %s238 = smul.addr %s237, 8
      %s239 = scalar_lea.vmem %s0, %s238
      %s240 = smul.u32 2, %s19
      %s241 = smul.u32 4, %s21
      %p242 = scmp.lt.s32.totalorder %s20, 11
      %s243 = scalar_select %p242, %s20, 11
      %p244 = scmp.lt.s32.totalorder %s241, 3
      %s245 = scalar_select %p244, %s241, 3
      %s246 = smul.addr %s243, 4
      %s247 = sadd.s32 %s245, %s246
      %s248 = smul.addr %s247, 8
      %s249 = scalar_lea.vmem %s1, %s248
      %s250 = smul.u32 4, %s21
      %p251 = scmp.lt.s32.totalorder %s20, 11
      %s252 = scalar_select %p251, %s20, 11
      %s253 = scalar_lea.vmem %s2, %s252
      %s254 = smul.u32 2, %s19
      %p255 = scmp.lt.s32.totalorder %s20, 11
      %s256 = scalar_select %p255, %s20, 11
      %p257 = scmp.lt.s32.totalorder %s254, 1
      %s258 = scalar_select %p257, %s254, 1
      %s259 = smul.addr %s256, 2
      %s260 = sadd.s32 %s258, %s259
      %s261 = smul.addr %s260, 8
      %s262 = scalar_lea.vmem %s3, %s261
      %s263 = smul.u32 2, %s19
      %p265 = scmp.eq.s32.totalorder %s21, 0
      // Predicated region
      $region33: #{tpu_custom_call.1} parent=31 // pred_check
        %p266 = pneg %p265
      $region34: #{tpu_custom_call.1} parent=31 // pred_check_branch
        %268 = sbr.rel (%p266) target = $region36
      $region35: #{tpu_custom_call.1} parent=31 // pred_region
        %vm269 = vcmask 64512
        %270 = vst.msk [vmem:[#allocation2] sm:$0xff] %vm269, 0.0
        %271 = vst.msk [vmem:[#allocation2 + $0x8] sm:$0xff] %vm269, 0.0
      $region36: #{tpu_custom_call.1} parent=31 // pred_fallthru
        _
      %v272 = vld [vmem:[#allocation2] sm:$0xff]
      %v273 = vld [vmem:[#allocation2 + $0x8] sm:$0xff]
      %v274 = vld [vmem:[%s239] sm:$0xff]
      %v275 = vld [vmem:[%s239 + $0x8] sm:$0xff]
      %v276 = vpack.c.bf16 %v275, %v274
      %v277 = vld [vmem:[%s249] sm:$0xff]
      %v278 = vld [vmem:[%s249 + $0x8] sm:$0xff]
      %v279 = vld [vmem:[%s249 + $0x10] sm:$0xff]
      %v280 = vld [vmem:[%s249 + $0x18] sm:$0xff]
      %v281 = vpack.c.bf16 %v278, %v277
      %v282 = vpack.c.bf16 %v280, %v279
      %vm283 = vcmask 261120
      %v285 = vsel %vm283, %v276, 0
      %287 = vmatprep.subr.bf16.mxu0 0
      %288 = vmatpush1.bf16.msra.mxu0 0
      %289 = vmatprep.subr.bf16.mxu0 0
      %290 = vmatpush1.bf16.msra.mxu0 0
      %291 = vmatprep.subr.bf16.mxu0 0
      %292 = vmatpush1.bf16.msra.mxu0 0
      %293 = vmatprep.subr.bf16.mxu0 0
      %294 = vmatpush1.bf16.msra.mxu0 0
      %295 = vmatprep.subr.bf16.mxu0 0
      %296 = vmatpush1.bf16.msra.mxu0 0
      %297 = vmatprep.subr.bf16.mxu0 0
      %298 = vmatpush1.bf16.msra.mxu0 0
      %299 = vmatprep.subr.bf16.mxu0 0
      %300 = vmatpush1.bf16.msra.mxu0 %v282
      %301 = vmatprep.subr.bf16.mxu0 0
      %302 = vmatpush1.bf16.msra.mxu0 %v281
      %303 = vmatprep.subr.bf16.mxu0 0
      %304 = vmatpush2.bf16.msra.mxu0 0
      %305 = vmatprep.subr.bf16.mxu0 0
      %306 = vmatpush2.bf16.msra.mxu0 0
      %307 = vmatprep.subr.bf16.mxu0 0
      %308 = vmatpush2.bf16.msra.mxu0 0
      %309 = vmatprep.subr.bf16.mxu0 0
      %310 = vmatpush2.bf16.msra.mxu0 0
      %311 = vmatprep.subr.bf16.mxu0 0
      %312 = vmatpush2.bf16.msra.mxu0 0
      %313 = vmatprep.subr.bf16.mxu0 0
      %314 = vmatpush2.bf16.msra.mxu0 0
      %315 = vmatprep.subr.bf16.mxu0 0
      %316 = vmatpush2.bf16.msra.mxu0 0
      %317 = vmatprep.subr.bf16.mxu0 0
      %318 = vmatpush2.bf16.msra.mxu0 0
      %319 = vmatprep.mubr.bf16.mxu0 0
      %320 = vmatmul.mubr.bf16.gmra.mxu0 %v285
      %v321 = vpop.f32.mrf.mxu0
      %v322 = vadd.f32 0.0, %v321
      %v323 = vpop.f32.mrf.mxu0
      %v324 = vpop.f32.mrf.mxu0
      %v325 = vadd.f32 0.0, %v324
      %v326 = vpop.f32.mrf.mxu0
      %327 = vdwg.mxu0
      %v328 = vadd.f32 %v272, %v322
      %v329 = vadd.f32 %v273, %v325
      %vm330 = vcmask 64512
      %331 = vst.msk [vmem:[#allocation2] sm:$0xff] %vm330, %v328
      %332 = vst.msk [vmem:[#allocation2 + $0x8] sm:$0xff] %vm330, %v329
      // Predicated region
      $region37: #{tpu_custom_call.1} parent=31 // pred_check
        %p333 = pneg %p265
      $region38: #{tpu_custom_call.1} parent=31 // pred_check_branch
        %335 = sbr.rel (%p333) target = $region40
      $region39: #{tpu_custom_call.1} parent=31 // pred_region
        %v336 = vld [vmem:[#allocation2] sm:$0xff]
        %v337 = vld [vmem:[#allocation2 + $0x8] sm:$0xff]
        %v338 = vld [vmem:[%s253] sm:$0x1]
        %v340 = vlaneseq
        %v341 = vshrl.u32 %v340, 7
        %v342 = vsub.s32 0, %v341
        %v343 = vrot.slane %v338, %v342
        %v345 = vadd.f32 %v336, %v343
        %v346 = vadd.f32 %v337, %v343
        %347 = vst.msk [vmem:[%s262] sm:$0xff] %vm330, %v345
        %348 = vst.msk [vmem:[%s262 + $0x8] sm:$0xff] %vm330, %v346
      $region40: #{tpu_custom_call.1} parent=31 // pred_fallthru
        _
      %s349 = smul.u32 2, %s19
      %p350 = scmp.lt.s32.totalorder %s20, 11
      %s351 = scalar_select %p350, %s20, 11
      %p352 = scmp.lt.s32.totalorder %s349, 1
      %s353 = scalar_select %p352, %s349, 1
      %s354 = smul.addr %s351, 2
      %s355 = sadd.s32 %s353, %s354
      %s356 = smul.addr %s355, 8
      %s357 = scalar_lea.vmem %s3, %s356
      // Predicated region
      $region41: #{tpu_custom_call.1} parent=31 // pred_check
        %p358 = pneg %p135
      $region42: #{tpu_custom_call.1} parent=31 // pred_check_branch
        %360 = sbr.rel (%p358) target = $region44
      $region43: #{tpu_custom_call.1} parent=31 // pred_region
        %s361 = smul.u32 2, %s19
      $region44: #{tpu_custom_call.1} parent=31 // pred_fallthru
        _
    $region32: #{tpu_custom_call.1} parent=5 // pred_fallthru
      _
    %p362 = scmp.le.s32.totalorder 2, %s9
    // Predicated region
    $region45: #{tpu_custom_call.1} parent=5 // pred_check
      %p363 = pneg %p362
    $region46: #{tpu_custom_call.1} parent=5 // pred_check_branch
      %365 = sbr.rel (%p363) target = $region48
    $region47: #{tpu_custom_call.1} parent=5 // pred_region
      %s366 = ssub.s32 %s9, 2
      // Predicated region
      $region49: #{tpu_custom_call.1} parent=47 // pred_check
        %p367 = pneg %p141
      $region50: #{tpu_custom_call.1} parent=47 // pred_check_branch
        %369 = sbr.rel (%p367) target = $region52
      $region51: #{tpu_custom_call.1} parent=47 // pred_region
        %s370 = smul.u32 2, %s22
        %p371 = scmp.lt.s32.totalorder %s23, 11
        %s372 = scalar_select %p371, %s23, 11
        %p373 = scmp.lt.s32.totalorder %s370, 1
        %s374 = scalar_select %p373, %s370, 1
        %s375 = smul.addr %s372, 2
        %s376 = sadd.s32 %s374, %s375
        %s377 = smul.addr %s376, 8
        %s378 = scalar_lea.vmem %s3, %s377
      $region52: #{tpu_custom_call.1} parent=47 // pred_fallthru
        _
    $region48: #{tpu_custom_call.1} parent=5 // pred_fallthru
      _
  $region6: #{tpu_custom_call.1} parent=0 // loop_footer
    %s13 = sadd.s32 1, %s9
  $region7: #{tpu_custom_call.1} parent=0 // loop_footer_branch
    %8 = sbr.rel target = $region3
  $region8: #{tpu_custom_call.1} parent=0 // loop_exit
    _

</llo_original>
